<compile_context>
chip_gen: v7x
topology: tpu7x:2x2x1
jax: 0.10.0
libtpu: 0.0.40
codegen_flags: <defaults>
</compile_context>

<pallas_src>
import functools

import jax
import jax.numpy as jnp
from jax import lax
from jax.experimental import pallas as pl
from jax.experimental.pallas import tpu as pltpu


def _adaln_kernel(x_ref, g_ref, b_ref, o_ref, *, eps: float, inv_d: float):
    # x_ref/o_ref: (block_b, block_t, D); g_ref/b_ref: (block_b, 1, D), resident over t.
    x = x_ref[...].astype(jnp.float32)
    # Fused one-pass statistics (single traversal of the f32 tile).
    s1 = jnp.sum(x, axis=-1, keepdims=True)                     # (bb, bt, 1)
    s2 = jnp.sum(x * x, axis=-1, keepdims=True)                 # (bb, bt, 1)
    mean = s1 * inv_d
    var = jnp.maximum(s2 * inv_d - mean * mean, 0.0)            # clamp: cancellation safety
    rstd = lax.rsqrt(var + eps)                                 # EUP slot, effectively free
    xn = (x - mean) * rstd                                      # (bb, bt, D)
    g = g_ref[...]
    b = b_ref[...]
    if jnp.dtype(o_ref.dtype) == jnp.bfloat16:
        # bf16 epilogue: packed VALU on v6e/v7x halves slot usage + vreg footprint.
        o_ref[...] = (xn.astype(jnp.bfloat16) * g.astype(jnp.bfloat16)
                      + b.astype(jnp.bfloat16))
    else:
        o_ref[...] = (xn * g.astype(jnp.float32)
                      + b.astype(jnp.float32)).astype(o_ref.dtype)


def _vmem_capacity_bytes() -> int:
    try:
        return int(pltpu.get_tpu_info().vmem_capacity_bytes)
    except Exception:
        return 64 * 1024 * 1024  # conservative (v7x per-TC VMEM)


def _choose_blocks(B: int, T: int, D: int, dtype, vmem_bytes: int) -> tuple[int, int]:
    itemsize = jnp.dtype(dtype).itemsize
    sub = 16 if itemsize < 4 else 8  # sublane multiple (packed dtypes need 16)
    # Real transient footprint per length-D tile row:
    #   2x double-buffered input + 2x double-buffered output (pipeline buffers)
    #   + ~2 live f32 working tiles inside the body (x in f32, normalized result).
    per_row = D * (2 * itemsize + 2 * itemsize + 2 * 4)
    budget = vmem_bytes // 2          # headroom for stats, gamma/beta, compiler scratch
    rows = int(budget // per_row)
    rows = max(sub, min(rows, 1024))  # per-step overhead amortization saturates ~512-1024

    if T <= rows:
        block_t = T                   # full-extent block along T is always legal
    else:
        block_t = max(sub, (rows // sub) * sub)

    # Batch tiling: for short sequences, lift rows-per-step toward ~512 so the
    # ~600-cycle per-grid-step overhead stops dominating the HBM roofline.
    target_rows = min(rows, 512)
    block_b = 1
    if block_t < target_rows:
        block_b = int(min(B, max(1, target_rows // max(block_t, 1))))
    return block_b, block_t


def _vmem_limit_bytes(block_b: int, block_t: int, D: int, dtype, vmem_bytes: int) -> int:
    itemsize = jnp.dtype(dtype).itemsize
    rows = block_b * block_t
    io_tile = rows * D * itemsize
    gb_tile = 2 * 2 * block_b * D * itemsize     # gamma + beta, double-buffered
    work = 2 * rows * D * 4                      # f32 working tiles in the body
    need = 2 * io_tile + 2 * io_tile + gb_tile + work
    limit = need * 5 // 4 + (4 << 20)            # 25% + 4 MiB margin for compiler scratch
    return int(max(16 << 20, min(limit, vmem_bytes)))


def adaln(x: jax.Array, gamma: jax.Array, beta: jax.Array,
          eps: float = 1e-6,
          block_t: int | None = None,
          block_b: int | None = None) -> jax.Array:
    """x: (B, T, D), gamma/beta: (B, D) -> (B, T, D)."""
    B, T, D = x.shape
    assert gamma.shape == (B, D) and beta.shape == (B, D)
    # Lane-dense last dim -> unmasked vector stores (biggest store-path lever).
    assert D % 128 == 0, f"AdaLN Pallas kernel requires D % 128 == 0, got D={D}"

    vmem_bytes = _vmem_capacity_bytes()
    auto_b, auto_t = _choose_blocks(B, T, D, x.dtype, vmem_bytes)
    if block_t is None:
        block_t = auto_t
        if block_b is None:
            block_b = auto_b
    if block_b is None:
        block_b = 1
    block_t = int(min(block_t, T))
    block_b = int(min(block_b, B))

    grid = (pl.cdiv(B, block_b), pl.cdiv(T, block_t))

    # Present gamma/beta as (B, 1, D); they stay resident across the t axis.
    gamma3 = gamma.reshape(B, 1, D)
    beta3 = beta.reshape(B, 1, D)

    kernel = functools.partial(_adaln_kernel, eps=float(eps), inv_d=1.0 / D)
    vmem_limit = _vmem_limit_bytes(block_b, block_t, D, x.dtype, vmem_bytes)

    return pl.pallas_call(
        kernel,
        out_shape=jax.ShapeDtypeStruct((B, T, D), x.dtype),
        grid_spec=pl.GridSpec(
            grid=grid,
            in_specs=[
                pl.BlockSpec((block_b, block_t, D), lambda b, t: (b, t, 0)),
                pl.BlockSpec((block_b, 1, D), lambda b, t: (b, 0, 0)),  # gamma, resident over t
                pl.BlockSpec((block_b, 1, D), lambda b, t: (b, 0, 0)),  # beta,  resident over t
            ],
            out_specs=pl.BlockSpec((block_b, block_t, D), lambda b, t: (b, t, 0)),
        ),
        compiler_params=pltpu.CompilerParams(
            dimension_semantics=("parallel", "parallel"),
            vmem_limit_bytes=vmem_limit,
        ),
    )(x, gamma3, beta3)


def adaln_reference(x, gamma, beta, eps=1e-6):
    x = x.astype(jnp.float32)
    mean = jnp.mean(x, axis=-1, keepdims=True)
    var = jnp.mean((x - mean) ** 2, axis=-1, keepdims=True)
    x_norm = (x - mean) / jnp.sqrt(var + eps)
    return (gamma.astype(jnp.float32)[:, None, :] * x_norm
            + beta.astype(jnp.float32)[:, None, :])


if __name__ == "__main__":
    key = jax.random.PRNGKey(0)
    keys = jax.random.split(key, 12)

    # --- small shape consistent with the module: batch=2, seq=8, hidden=128 ---
    B, T, D = 2, 8, 128
    x = jax.random.normal(keys[0], (B, T, D), dtype=jnp.float32)
    gamma = jax.random.normal(keys[1], (B, D), dtype=jnp.float32)
    beta = jax.random.normal(keys[2], (B, D), dtype=jnp.float32)

    out = adaln(x, gamma, beta)
    jax.block_until_ready(out)
    ref = adaln_reference(x, gamma, beta)
    assert out.shape == (B, T, D)
    assert jnp.allclose(out, ref, atol=5e-5, rtol=5e-5), float(jnp.max(jnp.abs(out - ref)))

    # --- T-tiled grid with a ragged final t block (T not divisible by block_t) ---
    B2, T2, D2 = 2, 40, 128
    x2 = jax.random.normal(keys[3], (B2, T2, D2), dtype=jnp.float32)
    g2 = jax.random.normal(keys[4], (B2, D2), dtype=jnp.float32)
    b2 = jax.random.normal(keys[5], (B2, D2), dtype=jnp.float32)
    out2 = adaln(x2, g2, b2, block_t=16, block_b=1)
    jax.block_until_ready(out2)
    ref2 = adaln_reference(x2, g2, b2)
    assert jnp.allclose(out2, ref2, atol=5e-5, rtol=5e-5), float(jnp.max(jnp.abs(out2 - ref2)))

    # --- batch-tiled grid with a ragged final batch block ---
    B3, T3, D3 = 3, 8, 128
    x3 = jax.random.normal(keys[6], (B3, T3, D3), dtype=jnp.float32)
    g3 = jax.random.normal(keys[7], (B3, D3), dtype=jnp.float32)
    b3 = jax.random.normal(keys[8], (B3, D3), dtype=jnp.float32)
    out3 = adaln(x3, g3, b3, block_t=8, block_b=2)
    jax.block_until_ready(out3)
    ref3 = adaln_reference(x3, g3, b3)
    assert jnp.allclose(out3, ref3, atol=5e-5, rtol=5e-5), float(jnp.max(jnp.abs(out3 - ref3)))

    # --- bf16 path (exercises the bf16 epilogue) ---
    B4, T4, D4 = 2, 16, 128
    x4 = jax.random.normal(keys[9], (B4, T4, D4), dtype=jnp.bfloat16)
    g4 = jax.random.normal(keys[10], (B4, D4), dtype=jnp.bfloat16)
    b4 = jax.random.normal(keys[11], (B4, D4), dtype=jnp.bfloat16)
    out4 = adaln(x4, g4, b4)
    jax.block_until_ready(out4)
    ref4 = adaln_reference(x4, g4, b4)
    assert out4.dtype == jnp.bfloat16
    assert jnp.allclose(out4.astype(jnp.float32), ref4, atol=8e-2, rtol=8e-2), \
        float(jnp.max(jnp.abs(out4.astype(jnp.float32) - ref4)))

    print("KERNEL_OK")
</pallas_src>

<mosaic_0001>
module attributes {stable_mosaic.version = 11 : i64} {
  func.func @_adaln_kernel(%arg0: i32, %arg1: i32, %arg2: memref<2x8x128xf32, #tpu.memory_space<vmem>>, %arg3: memref<2x1x128xf32, #tpu.memory_space<vmem>>, %arg4: memref<2x1x128xf32, #tpu.memory_space<vmem>>, %arg5: memref<2x8x128xf32, #tpu.memory_space<vmem>>) attributes {dimension_semantics = [#tpu.dimension_semantics<parallel>, #tpu.dimension_semantics<parallel>], iteration_bounds = array<i64: 1, 1>, scalar_prefetch = 0 : i64, scratch_operands = 0 : i64, tpu.core_type = #tpu.core_type<tc>, window_params = [{transform_indices = @transform_0, window_bounds = array<i64: 2, 8, 128>}, {transform_indices = @transform_1, window_bounds = array<i64: 2, 1, 128>}, {transform_indices = @transform_2, window_bounds = array<i64: 2, 1, 128>}, {transform_indices = @transform_3, window_bounds = array<i64: 2, 8, 128>}]} {
    %c0 = arith.constant 0 : index
    %c0_0 = arith.constant 0 : index
    %c0_1 = arith.constant 0 : index
    %0 = vector.load %arg2[%c0, %c0_0, %c0_1] : memref<2x8x128xf32, #tpu.memory_space<vmem>>, vector<2x8x128xf32>
    %cst = arith.constant dense<0.000000e+00> : vector<2x8xf32>
    %1 = vector.multi_reduction <add>, %0, %cst [2] : vector<2x8x128xf32> to vector<2x8xf32>
    %2 = vector.shape_cast %1 : vector<2x8xf32> to vector<2x8x1xf32>
    %3 = arith.mulf %0, %0 : vector<2x8x128xf32>
    %cst_2 = arith.constant dense<0.000000e+00> : vector<2x8xf32>
    %4 = vector.multi_reduction <add>, %3, %cst_2 [2] : vector<2x8x128xf32> to vector<2x8xf32>
    %5 = vector.shape_cast %4 : vector<2x8xf32> to vector<2x8x1xf32>
    %cst_3 = arith.constant 7.812500e-03 : f32
    %6 = vector.broadcast %cst_3 : f32 to vector<2x8x1xf32>
    %7 = arith.mulf %2, %6 : vector<2x8x1xf32>
    %cst_4 = arith.constant 7.812500e-03 : f32
    %8 = vector.broadcast %cst_4 : f32 to vector<2x8x1xf32>
    %9 = arith.mulf %5, %8 : vector<2x8x1xf32>
    %10 = arith.mulf %7, %7 : vector<2x8x1xf32>
    %11 = arith.subf %9, %10 : vector<2x8x1xf32>
    %cst_5 = arith.constant 0.000000e+00 : f32
    %12 = vector.broadcast %cst_5 : f32 to vector<2x8x1xf32>
    %13 = arith.maximumf %11, %12 : vector<2x8x1xf32>
    %cst_6 = arith.constant 9.99999997E-7 : f32
    %14 = vector.broadcast %cst_6 : f32 to vector<2x8x1xf32>
    %15 = arith.addf %13, %14 : vector<2x8x1xf32>
    %16 = math.rsqrt %15 : vector<2x8x1xf32>
    %17 = vector.broadcast %7 : vector<2x8x1xf32> to vector<2x8x128xf32>
    %18 = arith.subf %0, %17 : vector<2x8x128xf32>
    %19 = vector.broadcast %16 : vector<2x8x1xf32> to vector<2x8x128xf32>
    %20 = arith.mulf %18, %19 : vector<2x8x128xf32>
    %c0_7 = arith.constant 0 : index
    %c0_8 = arith.constant 0 : index
    %c0_9 = arith.constant 0 : index
    %21 = vector.load %arg3[%c0_7, %c0_8, %c0_9] : memref<2x1x128xf32, #tpu.memory_space<vmem>>, vector<2x1x128xf32>
    %c0_10 = arith.constant 0 : index
    %c0_11 = arith.constant 0 : index
    %c0_12 = arith.constant 0 : index
    %22 = vector.load %arg4[%c0_10, %c0_11, %c0_12] : memref<2x1x128xf32, #tpu.memory_space<vmem>>, vector<2x1x128xf32>
    %23 = vector.broadcast %21 : vector<2x1x128xf32> to vector<2x8x128xf32>
    %24 = arith.mulf %20, %23 : vector<2x8x128xf32>
    %25 = vector.broadcast %22 : vector<2x1x128xf32> to vector<2x8x128xf32>
    %26 = arith.addf %24, %25 : vector<2x8x128xf32>
    %c0_13 = arith.constant 0 : index
    %c0_14 = arith.constant 0 : index
    %c0_15 = arith.constant 0 : index
    %27 = vector.load %arg5[%c0_13, %c0_14, %c0_15] : memref<2x8x128xf32, #tpu.memory_space<vmem>>, vector<2x8x128xf32>
    tpu.vector_store %arg5[%c0_13, %c0_14, %c0_15], %26 {strides = array<i32>} : memref<2x8x128xf32, #tpu.memory_space<vmem>>, vector<2x8x128xf32>,
    return
  }
  func.func @transform_0(%arg0: i32, %arg1: i32) -> (i32, i32, i32) {
    %c0_i32 = arith.constant 0 : i32
    %c0_i32_0 = arith.constant 0 : i32
    return %arg0, %arg1, %c0_i32 : i32, i32, i32
  }
  func.func @transform_1(%arg0: i32, %arg1: i32) -> (i32, i32, i32) {
    %c0_i32 = arith.constant 0 : i32
    %c0_i32_0 = arith.constant 0 : i32
    %c0_i32_1 = arith.constant 0 : i32
    return %arg0, %c0_i32, %c0_i32_0 : i32, i32, i32
  }
  func.func @transform_2(%arg0: i32, %arg1: i32) -> (i32, i32, i32) {
    %c0_i32 = arith.constant 0 : i32
    %c0_i32_0 = arith.constant 0 : i32
    %c0_i32_1 = arith.constant 0 : i32
    return %arg0, %c0_i32, %c0_i32_0 : i32, i32, i32
  }
  func.func @transform_3(%arg0: i32, %arg1: i32) -> (i32, i32, i32) {
    %c0_i32 = arith.constant 0 : i32
    %c0_i32_0 = arith.constant 0 : i32
    return %arg0, %arg1, %c0_i32 : i32, i32, i32
  }
}

</mosaic_0001>

<llo_original>
// kernel: tpu_custom_call.1
$region0: #{tpu_custom_call.1}
  #allocation0 [shape = 'u32[]', space=smem, size = 0x4, offset = 0x4, fixed_abs, tag = 'smem constant byte address 0x4 - core index']
  #allocation1 [shape = 'u32[144,128]{1,0:T(1,128)}', space=vmem, size = 0x12000, scoped, tag = 'internal scratch']
  %s0 = inlined_call_operand.hbm [shape: f32[2,8,128], index: 0, kind: input, shape index: {}]
  %s1 = inlined_call_operand.vmem [shape: f32[2,1,128], index: 1, kind: input, shape index: {}]
  %s2 = inlined_call_operand.vmem [shape: f32[2,1,128], index: 2, kind: input, shape index: {}]
  %s3 = inlined_call_operand.hbm [shape: f32[2,8,128], index: 3, kind: output, shape index: {}]
  %s4 = sld [smem:[#allocation0]]
  $region26: #{tpu_custom_call.1} parent=0
    _
  %s6 = ssub.s32 1, %s4
  %s7 = scalar_select 0, %s6, %s4
  $region1: #{tpu_custom_call.1} parent=0
    #allocation2 [shape = 'u8[8192]{0}', space=vmem, size = 0x2000, scoped, tag = 'input window, operand 0, single buffered']
    #allocation3 [shape = 's32[1]{0}', space=sflag, size = 0x4, scoped, tag = 'scoped memory for tpu_custom_call.1']
    #allocation4 [shape = 's32[1]{0}', space=sflag, size = 0x4, scoped, tag = 'scoped memory for tpu_custom_call.1']
    #allocation5 [shape = 'u8[8192]{0}', space=vmem, size = 0x2000, scoped, tag = 'output window, operand 0, single buffered']
    %8 = vsyncpa [#allocation3], 0
    %9 = vsyncpa [#allocation4], 0
    // Predicated region
    $region2: #{tpu_custom_call.1} parent=1 // pred_check
      _
    $region3: #{tpu_custom_call.1} parent=1 // pred_check_branch
      %11 = sbr.rel (0) target = $region5
    $region4: #{tpu_custom_call.1} parent=1 // pred_region
      %s13 = ssub.s32 256, 256
      %14 = vsyncadd [#allocation3], %s13
      %s15 = sshll.u32 [#allocation2], 4
      %s16 = int_to_ptr.vmem [resolvable:$true] %s15
      %21 = dma.hbm_to_vmem [thread:$0]  %s0, 256, %s16, [#allocation3], 128, 128, 8
    $region5: #{tpu_custom_call.1} parent=1 // pred_fallthru
      _
    // Predicated region
    $region6: #{tpu_custom_call.1} parent=1 // pred_check
      _
    $region7: #{tpu_custom_call.1} parent=1 // pred_check_branch
      %23 = sbr.rel (0) target = $region9
    $region8: #{tpu_custom_call.1} parent=1 // pred_region
      _
    $region9: #{tpu_custom_call.1} parent=1 // pred_fallthru
      _
    // Predicated region
    $region10: #{tpu_custom_call.1} parent=1 // pred_check
      _
    $region11: #{tpu_custom_call.1} parent=1 // pred_check_branch
      %25 = sbr.rel (0) target = $region13
    $region12: #{tpu_custom_call.1} parent=1 // pred_region
      _
    $region13: #{tpu_custom_call.1} parent=1 // pred_fallthru
      _
    // Predicated region
    $region14: #{tpu_custom_call.1} parent=1 // pred_check
      _
    $region15: #{tpu_custom_call.1} parent=1 // pred_check_branch
      %27 = sbr.rel (0) target = $region17
    $region16: #{tpu_custom_call.1} parent=1 // pred_region
      %28 = dma.done [#allocation3], 256
    $region17: #{tpu_custom_call.1} parent=1 // pred_fallthru
      _
    %v29 = vld [vmem:[#allocation2] sm:$0xff]
    %v30 = vld [vmem:[#allocation2 + $0x8] sm:$0xff]
    %31 = vadd.xlane.f32.xlu0 %v29
    %v32 = vpop.xlane.xlu0 %31
    %33 = vadd.xlane.f32.xlu0 %v30
    %v34 = vpop.xlane.xlu0 %33
    %v35 = vmul.f32 %v29, %v29
    %v36 = vmul.f32 %v30, %v30
    %37 = vadd.xlane.f32.xlu0 %v35
    %v38 = vpop.xlane.xlu0 %37
    %39 = vadd.xlane.f32.xlu0 %v36
    %v40 = vpop.xlane.xlu0 %39
    %v41 = vmul.f32 %v32, 0.0078125
    %v42 = vmul.f32 %v34, 0.0078125
    %v43 = vmul.f32 %v38, 0.0078125
    %v44 = vmul.f32 %v40, 0.0078125
    %v45 = vmul.f32 %v41, %v41
    %v46 = vmul.f32 %v42, %v42
    %v47 = vsub.f32 %v43, %v45
    %v48 = vsub.f32 %v44, %v46
    %v49 = vmax.f32 %v47, 0.0
    %v50 = vmax.f32 %v48, 0.0
    %v51 = vadd.f32 %v49, 1e-06
    %v52 = vadd.f32 %v50, 1e-06
    %v53 = vrsqrt.pop %v51
    %v54 = vrsqrt.pop %v52
    %v55 = vsub.f32 %v29, %v41
    %v56 = vsub.f32 %v30, %v42
    %v57 = vmul.f32 %v55, %v53
    %v58 = vmul.f32 %v56, %v54
    %v59 = vld [vmem:[%s1] sm:$0x1]
    %v60 = vld [vmem:[%s1 + $0x1] sm:$0x1]
    %v61 = vld [vmem:[%s2] sm:$0x1]
    %v62 = vld [vmem:[%s2 + $0x1] sm:$0x1]
    %v65 = vlaneseq
    %v66 = vshrl.u32 %v65, 7
    %v67 = vsub.s32 0, %v66
    %v68 = vrot.slane %v59, %v67
    %v69 = vlaneseq
    %v70 = vshrl.u32 %v69, 7
    %v71 = vsub.s32 0, %v70
    %v72 = vrot.slane %v60, %v71
    %v75 = vmul.f32 %v57, %v68
    %v76 = vmul.f32 %v58, %v72
    %v79 = vlaneseq
    %v80 = vshrl.u32 %v79, 7
    %v81 = vsub.s32 0, %v80
    %v82 = vrot.slane %v61, %v81
    %v83 = vlaneseq
    %v84 = vshrl.u32 %v83, 7
    %v85 = vsub.s32 0, %v84
    %v86 = vrot.slane %v62, %v85
    %v89 = vadd.f32 %v75, %v82
    %v90 = vadd.f32 %v76, %v86
    %91 = vst [vmem:[#allocation5] sm:$0xff] %v89
    %92 = vst [vmem:[#allocation5 + $0x8] sm:$0xff] %v90
    // Predicated region
    $region18: #{tpu_custom_call.1} parent=1 // pred_check
      _
    $region19: #{tpu_custom_call.1} parent=1 // pred_check_branch
      %94 = sbr.rel (0) target = $region21
    $region20: #{tpu_custom_call.1} parent=1 // pred_region
      %s96 = ssub.s32 256, 256
      %97 = vsyncadd [#allocation4], %s96
      %s98 = sshll.u32 [#allocation5], 4
      %s99 = int_to_ptr.vmem [resolvable:$true] %s98
      %104 = dma.vmem_to_hbm [thread:$0]  %s99, 256, %s3, [#allocation4], 128, 128, 8
    $region21: #{tpu_custom_call.1} parent=1 // pred_fallthru
      _
    // Predicated region
    $region22: #{tpu_custom_call.1} parent=1 // pred_check
      _
    $region23: #{tpu_custom_call.1} parent=1 // pred_check_branch
      %106 = sbr.rel (0) target = $region25
    $region24: #{tpu_custom_call.1} parent=1 // pred_region
      %107 = dma.done [#allocation4], 256
    $region25: #{tpu_custom_call.1} parent=1 // pred_fallthru
      _
    %108 = vsyncpa [#allocation3], 1
    %109 = vsyncpa [#allocation4], 1

</llo_original>
